<compile_context>
chip_gen: v7x
topology: tpu7x:2x2x1
jax: 0.10.0
libtpu: 0.0.40
codegen_flags: <defaults>
</compile_context>

<pallas_src>
import math

import jax
import jax.numpy as jnp
from jax.experimental import pallas as pl
from jax.experimental.pallas import tpu as pltpu


_TILE_TARGET_BYTES = 2 * 1024 * 1024   # ~2 MiB per input stream per buffer
_TILE_FLOOR_BYTES = 256 * 1024         # never shrink tiles below this for step count


def _cdiv(a, b):
    return (a + b - 1) // b


def _round_up(n, m):
    return ((n + m - 1) // m) * m


def _round_down(n, m):
    return (n // m) * m


def _pick_tile_rows(n_rows, row_bytes):
    """Row-tile height: byte-sized, multiple of 8, with enough grid steps for
    megacore sharding + DMA/compute overlap when that does not shrink tiles
    below the byte floor."""
    tm_cap = max(8, _round_down(_TILE_TARGET_BYTES // row_bytes, 8))
    tm_floor = max(8, _round_down(_TILE_FLOOR_BYTES // row_bytes, 8))
    # Prefer >= 8 grid steps (>= 4 per TensorCore on v7x).
    tm_steps = max(8, _round_up(_cdiv(n_rows, 8), 8))
    tm = max(min(tm_cap, tm_steps), tm_floor)
    if n_rows <= tm:
        # Single full-array block (block dims equal to array dims are exempt
        # from the (8, 128) divisibility rule).
        return n_rows, 1
    return tm, _cdiv(n_rows, tm)


def _gated_residual_kernel(x_ref, res_ref, w_ref, out_ref):
    """Unpacked path: one (tm, D) row tile; w_ref = [wx+wd ; wr-wd], (2, D) f32."""
    x = x_ref[...].astype(jnp.float32)
    r = res_ref[...].astype(jnp.float32)
    # Folded gate projection: concat([x, r, x-r]) @ W.T == x@(wx+wd) + r@(wr-wd)
    logit = jnp.sum(x * w_ref[0:1, :] + r * w_ref[1:2, :],
                    axis=-1, keepdims=True)                 # (tm, 1)
    gate = 1.0 / (1.0 + jnp.exp(-logit))                    # exp -> EUP
    # x*gate + r*(1-gate) == r + gate*(x - r)
    out_ref[...] = (r + gate * (x - r)).astype(out_ref.dtype)


def _gated_residual_packed_kernel(x_ref, res_ref, w_ref, mask_ref, out_ref):
    """Lane-dense path: g = 128//D logical rows share one 128-lane row.

    x_ref/res_ref: (tm, 128) in native dtype; w_ref: (2, 128) f32 folded weights
    tiled g times; mask_ref: (g, 128) f32 one-hot segment masks. The per-row
    logit is a masked full-lane reduce (exact f32), and the gate is scattered
    back across its D-lane segment with the same mask, so all loads/stores stay
    full-width and unmasked.
    """
    x = x_ref[...].astype(jnp.float32)
    r = res_ref[...].astype(jnp.float32)
    prod = x * w_ref[0:1, :] + r * w_ref[1:2, :]            # (tm, 128)
    gate = jnp.zeros_like(prod)
    for s in range(mask_ref.shape[0]):                      # static unroll, g <= 16
        m = mask_ref[s:s + 1, :]                            # (1, 128)
        logit_s = jnp.sum(prod * m, axis=-1, keepdims=True)  # (tm, 1), exact f32
        gate_s = 1.0 / (1.0 + jnp.exp(-logit_s))
        gate = gate + gate_s * m
    out_ref[...] = (r + gate * (x - r)).astype(out_ref.dtype)


@jax.jit
def gated_residual(x, res, w):
    """x, res: (..., dim).  w: PyTorch Linear weight, shape (1, 3*dim)."""
    D = x.shape[-1]
    orig_shape = x.shape
    out_dtype = jnp.result_type(x.dtype, res.dtype)

    N = 1
    for s in x.shape[:-1]:
        N *= s

    # Fold the concat algebraically (done once, in f32).
    wf = w.reshape(3 * D).astype(jnp.float32)
    wa = wf[:D] + wf[2 * D:]          # multiplies x
    wb = wf[D:2 * D] - wf[2 * D:]     # multiplies res

    # Lane-dense packing: g logical rows per 128-lane row when it is free.
    g = 128 // D if (8 <= D < 128 and 128 % D == 0) else 1
    packed = (g > 1) and (N % g == 0) and N > 0

    if packed:
        width = g * D
        n_rows = N // g
        xf = x.reshape(n_rows, width)            # metadata-only reshape
        rf = res.reshape(n_rows, width)
        w2 = jnp.stack([jnp.tile(wa, g), jnp.tile(wb, g)])      # (2, 128)
        seg_id = jnp.arange(width, dtype=jnp.int32) // D
        masks = (seg_id[None, :] ==
                 jnp.arange(g, dtype=jnp.int32)[:, None]).astype(jnp.float32)  # (g, 128)
    else:
        width = D
        n_rows = N
        xf = x.reshape(n_rows, width)
        rf = res.reshape(n_rows, width)
        w2 = jnp.stack([wa, wb])                                 # (2, D)
        masks = None

    itemsize = max(jnp.dtype(x.dtype).itemsize, jnp.dtype(res.dtype).itemsize)
    tm, n_steps = _pick_tile_rows(n_rows, width * itemsize)

    row_spec = pl.BlockSpec((tm, width), lambda i: (i, 0))
    w_spec = pl.BlockSpec((2, width), lambda i: (0, 0))          # resident

    cost = pl.CostEstimate(
        flops=int(10 * N * D),
        transcendentals=int(N),
        bytes_accessed=int(3 * N * D * itemsize + 2 * width * 4),
    )
    cparams = pltpu.CompilerParams(dimension_semantics=("parallel",))
    out_shape = jax.ShapeDtypeStruct((n_rows, width), out_dtype)

    if packed:
        out = pl.pallas_call(
            _gated_residual_packed_kernel,
            grid=(n_steps,),
            in_specs=[row_spec, row_spec, w_spec,
                      pl.BlockSpec((g, width), lambda i: (0, 0))],
            out_specs=row_spec,
            out_shape=out_shape,
            compiler_params=cparams,
            cost_estimate=cost,
        )(xf, rf, w2, masks)
    else:
        out = pl.pallas_call(
            _gated_residual_kernel,
            grid=(n_steps,),
            in_specs=[row_spec, row_spec, w_spec],
            out_specs=row_spec,
            out_shape=out_shape,
            compiler_params=cparams,
            cost_estimate=cost,
        )(xf, rf, w2)

    return out.reshape(orig_shape)


def _reference(x, res, w):
    """Pure-JAX reproduction of the PyTorch GatedResidual.forward."""
    gate_in = jnp.concatenate([x, res, x - res], axis=-1)      # (..., 3*dim)
    gate = jax.nn.sigmoid(gate_in @ w.T)                       # (..., 1)
    return x * gate + res * (1.0 - gate)


if __name__ == "__main__":
    key = jax.random.PRNGKey(0)

    def _check(lead_shape, dim, ks):
        kx, kr, kw = jax.random.split(ks, 3)
        # PyTorch Linear default init: U(-1/sqrt(fan_in), 1/sqrt(fan_in)), fan_in = 3*dim.
        bound = 1.0 / math.sqrt(3 * dim)
        w = jax.random.uniform(kw, (1, 3 * dim), jnp.float32, -bound, bound)
        x = jax.random.normal(kx, lead_shape + (dim,), jnp.float32)
        res = jax.random.normal(kr, lead_shape + (dim,), jnp.float32)
        out = gated_residual(x, res, w)
        jax.block_until_ready(out)
        ref = _reference(x, res, w)
        assert out.shape == ref.shape
        max_err = jnp.max(jnp.abs(out - ref))
        assert jnp.allclose(out, ref, atol=1e-5, rtol=1e-5), (
            f"shape {lead_shape + (dim,)}: max abs err {max_err}")

    # Primary module-like shape: batch=2, nodes=8, hidden=32 -> lane-packed path.
    k1, k2, k3 = jax.random.split(key, 3)
    _check((2, 8), 32, k1)
    # D that does not divide 128 -> unpacked fallback path (full-array block).
    _check((2, 8), 40, k2)
    # Larger row count -> multi-step grid with a ragged (masked) last block.
    _check((6, 500), 32, k3)

    print("KERNEL_OK")
</pallas_src>

<mosaic_0001>
module attributes {stable_mosaic.version = 11 : i64} {
  func.func @_gated_residual_packed_kernel(%arg0: i32, %arg1: memref<4x128xf32, #tpu.memory_space<vmem>>, %arg2: memref<4x128xf32, #tpu.memory_space<vmem>>, %arg3: memref<2x128xf32, #tpu.memory_space<vmem>>, %arg4: memref<4x128xf32, #tpu.memory_space<vmem>>, %arg5: memref<4x128xf32, #tpu.memory_space<vmem>>) attributes {dimension_semantics = [#tpu.dimension_semantics<parallel>], iteration_bounds = array<i64: 1>, scalar_prefetch = 0 : i64, scratch_operands = 0 : i64, tpu.core_type = #tpu.core_type<tc>, window_params = [{transform_indices = @transform_0, window_bounds = array<i64: 4, 128>}, {transform_indices = @transform_1, window_bounds = array<i64: 4, 128>}, {pipeline_mode = #tpu.pipeline_mode<synchronous>, transform_indices = @transform_2, window_bounds = array<i64: 2, 128>}, {pipeline_mode = #tpu.pipeline_mode<synchronous>, transform_indices = @transform_3, window_bounds = array<i64: 4, 128>}, {transform_indices = @transform_4, window_bounds = array<i64: 4, 128>}]} {
    %c0 = arith.constant 0 : index
    %c0_0 = arith.constant 0 : index
    %0 = vector.load %arg1[%c0, %c0_0] : memref<4x128xf32, #tpu.memory_space<vmem>>, vector<4x128xf32>
    %c0_1 = arith.constant 0 : index
    %c0_2 = arith.constant 0 : index
    %1 = vector.load %arg2[%c0_1, %c0_2] : memref<4x128xf32, #tpu.memory_space<vmem>>, vector<4x128xf32>
    %c0_3 = arith.constant 0 : index
    %c0_4 = arith.constant 0 : index
    %2 = vector.load %arg3[%c0_3, %c0_4] : memref<2x128xf32, #tpu.memory_space<vmem>>, vector<1x128xf32>
    %3 = vector.broadcast %2 : vector<1x128xf32> to vector<4x128xf32>
    %4 = arith.mulf %0, %3 : vector<4x128xf32>
    %c1 = arith.constant 1 : index
    %c0_5 = arith.constant 0 : index
    %5 = vector.load %arg3[%c1, %c0_5] : memref<2x128xf32, #tpu.memory_space<vmem>>, vector<1x128xf32>
    %6 = vector.broadcast %5 : vector<1x128xf32> to vector<4x128xf32>
    %7 = arith.mulf %1, %6 : vector<4x128xf32>
    %8 = arith.addf %4, %7 : vector<4x128xf32>
    %cst = arith.constant 0.000000e+00 : f32
    %9 = vector.broadcast %cst : f32 to vector<4x128xf32>
    %c0_6 = arith.constant 0 : index
    %c0_7 = arith.constant 0 : index
    %10 = vector.load %arg4[%c0_6, %c0_7] : memref<4x128xf32, #tpu.memory_space<vmem>>, vector<1x128xf32>
    %11 = vector.broadcast %10 : vector<1x128xf32> to vector<4x128xf32>
    %12 = arith.mulf %8, %11 : vector<4x128xf32>
    %cst_8 = arith.constant dense<0.000000e+00> : vector<4xf32>
    %13 = vector.multi_reduction <add>, %12, %cst_8 [1] : vector<4x128xf32> to vector<4xf32>
    %14 = vector.shape_cast %13 : vector<4xf32> to vector<4x1xf32>
    %cst_9 = arith.constant 0.000000e+00 : f32
    %15 = vector.broadcast %cst_9 : f32 to vector<4x1xf32>
    %16 = arith.subf %15, %14 : vector<4x1xf32>
    %17 = math.exp %16 : vector<4x1xf32>
    %cst_10 = arith.constant 1.000000e+00 : f32
    %18 = vector.broadcast %cst_10 : f32 to vector<4x1xf32>
    %19 = arith.addf %18, %17 : vector<4x1xf32>
    %cst_11 = arith.constant 1.000000e+00 : f32
    %20 = vector.broadcast %cst_11 : f32 to vector<4x1xf32>
    %21 = arith.divf %20, %19 : vector<4x1xf32>
    %22 = vector.broadcast %21 : vector<4x1xf32> to vector<4x128xf32>
    %23 = vector.broadcast %10 : vector<1x128xf32> to vector<4x128xf32>
    %24 = arith.mulf %22, %23 : vector<4x128xf32>
    %25 = arith.addf %9, %24 : vector<4x128xf32>
    %c1_12 = arith.constant 1 : index
    %c0_13 = arith.constant 0 : index
    %26 = vector.load %arg4[%c1_12, %c0_13] : memref<4x128xf32, #tpu.memory_space<vmem>>, vector<1x128xf32>
    %27 = vector.broadcast %26 : vector<1x128xf32> to vector<4x128xf32>
    %28 = arith.mulf %8, %27 : vector<4x128xf32>
    %cst_14 = arith.constant dense<0.000000e+00> : vector<4xf32>
    %29 = vector.multi_reduction <add>, %28, %cst_14 [1] : vector<4x128xf32> to vector<4xf32>
    %30 = vector.shape_cast %29 : vector<4xf32> to vector<4x1xf32>
    %cst_15 = arith.constant 0.000000e+00 : f32
    %31 = vector.broadcast %cst_15 : f32 to vector<4x1xf32>
    %32 = arith.subf %31, %30 : vector<4x1xf32>
    %33 = math.exp %32 : vector<4x1xf32>
    %cst_16 = arith.constant 1.000000e+00 : f32
    %34 = vector.broadcast %cst_16 : f32 to vector<4x1xf32>
    %35 = arith.addf %34, %33 : vector<4x1xf32>
    %cst_17 = arith.constant 1.000000e+00 : f32
    %36 = vector.broadcast %cst_17 : f32 to vector<4x1xf32>
    %37 = arith.divf %36, %35 : vector<4x1xf32>
    %38 = vector.broadcast %37 : vector<4x1xf32> to vector<4x128xf32>
    %39 = vector.broadcast %26 : vector<1x128xf32> to vector<4x128xf32>
    %40 = arith.mulf %38, %39 : vector<4x128xf32>
    %41 = arith.addf %25, %40 : vector<4x128xf32>
    %c2 = arith.constant 2 : index
    %c0_18 = arith.constant 0 : index
    %42 = vector.load %arg4[%c2, %c0_18] : memref<4x128xf32, #tpu.memory_space<vmem>>, vector<1x128xf32>
    %43 = vector.broadcast %42 : vector<1x128xf32> to vector<4x128xf32>
    %44 = arith.mulf %8, %43 : vector<4x128xf32>
    %cst_19 = arith.constant dense<0.000000e+00> : vector<4xf32>
    %45 = vector.multi_reduction <add>, %44, %cst_19 [1] : vector<4x128xf32> to vector<4xf32>
    %46 = vector.shape_cast %45 : vector<4xf32> to vector<4x1xf32>
    %cst_20 = arith.constant 0.000000e+00 : f32
    %47 = vector.broadcast %cst_20 : f32 to vector<4x1xf32>
    %48 = arith.subf %47, %46 : vector<4x1xf32>
    %49 = math.exp %48 : vector<4x1xf32>
    %cst_21 = arith.constant 1.000000e+00 : f32
    %50 = vector.broadcast %cst_21 : f32 to vector<4x1xf32>
    %51 = arith.addf %50, %49 : vector<4x1xf32>
    %cst_22 = arith.constant 1.000000e+00 : f32
    %52 = vector.broadcast %cst_22 : f32 to vector<4x1xf32>
    %53 = arith.divf %52, %51 : vector<4x1xf32>
    %54 = vector.broadcast %53 : vector<4x1xf32> to vector<4x128xf32>
    %55 = vector.broadcast %42 : vector<1x128xf32> to vector<4x128xf32>
    %56 = arith.mulf %54, %55 : vector<4x128xf32>
    %57 = arith.addf %41, %56 : vector<4x128xf32>
    %c3 = arith.constant 3 : index
    %c0_23 = arith.constant 0 : index
    %58 = vector.load %arg4[%c3, %c0_23] : memref<4x128xf32, #tpu.memory_space<vmem>>, vector<1x128xf32>
    %59 = vector.broadcast %58 : vector<1x128xf32> to vector<4x128xf32>
    %60 = arith.mulf %8, %59 : vector<4x128xf32>
    %cst_24 = arith.constant dense<0.000000e+00> : vector<4xf32>
    %61 = vector.multi_reduction <add>, %60, %cst_24 [1] : vector<4x128xf32> to vector<4xf32>
    %62 = vector.shape_cast %61 : vector<4xf32> to vector<4x1xf32>
    %cst_25 = arith.constant 0.000000e+00 : f32
    %63 = vector.broadcast %cst_25 : f32 to vector<4x1xf32>
    %64 = arith.subf %63, %62 : vector<4x1xf32>
    %65 = math.exp %64 : vector<4x1xf32>
    %cst_26 = arith.constant 1.000000e+00 : f32
    %66 = vector.broadcast %cst_26 : f32 to vector<4x1xf32>
    %67 = arith.addf %66, %65 : vector<4x1xf32>
    %cst_27 = arith.constant 1.000000e+00 : f32
    %68 = vector.broadcast %cst_27 : f32 to vector<4x1xf32>
    %69 = arith.divf %68, %67 : vector<4x1xf32>
    %70 = vector.broadcast %69 : vector<4x1xf32> to vector<4x128xf32>
    %71 = vector.broadcast %58 : vector<1x128xf32> to vector<4x128xf32>
    %72 = arith.mulf %70, %71 : vector<4x128xf32>
    %73 = arith.addf %57, %72 : vector<4x128xf32>
    %74 = arith.subf %0, %1 : vector<4x128xf32>
    %75 = arith.mulf %73, %74 : vector<4x128xf32>
    %76 = arith.addf %1, %75 : vector<4x128xf32>
    %c0_28 = arith.constant 0 : index
    %c0_29 = arith.constant 0 : index
    %77 = vector.load %arg5[%c0_28, %c0_29] : memref<4x128xf32, #tpu.memory_space<vmem>>, vector<4x128xf32>
    tpu.vector_store %arg5[%c0_28, %c0_29], %76 {strides = array<i32>} : memref<4x128xf32, #tpu.memory_space<vmem>>, vector<4x128xf32>,
    return
  }
  func.func @transform_0(%arg0: i32) -> (i32, i32) {
    %c0_i32 = arith.constant 0 : i32
    %c0_i32_0 = arith.constant 0 : i32
    return %arg0, %c0_i32 : i32, i32
  }
  func.func @transform_1(%arg0: i32) -> (i32, i32) {
    %c0_i32 = arith.constant 0 : i32
    %c0_i32_0 = arith.constant 0 : i32
    return %arg0, %c0_i32 : i32, i32
  }
  func.func @transform_2(%arg0: i32) -> (i32, i32) {
    %c0_i32 = arith.constant 0 : i32
    %c0_i32_0 = arith.constant 0 : i32
    %c0_i32_1 = arith.constant 0 : i32
    return %c0_i32, %c0_i32_0 : i32, i32
  }
  func.func @transform_3(%arg0: i32) -> (i32, i32) {
    %c0_i32 = arith.constant 0 : i32
    %c0_i32_0 = arith.constant 0 : i32
    %c0_i32_1 = arith.constant 0 : i32
    return %c0_i32, %c0_i32_0 : i32, i32
  }
  func.func @transform_4(%arg0: i32) -> (i32, i32) {
    %c0_i32 = arith.constant 0 : i32
    %c0_i32_0 = arith.constant 0 : i32
    return %arg0, %c0_i32 : i32, i32
  }
}

</mosaic_0001>

<llo_original>
// kernel: tile.18
$region0: #{tile.18}
  %s0 = inlined_call_operand.vmem [shape: f32[4,32], index: 0, kind: input, shape index: {}]
  %s1 = inlined_call_operand.vmem [shape: f32[1,128], index: 1, kind: output, shape index: {}]
  $region1: #{tile.18} parent=0
    #allocation0 [shape = 'u8[4096]{0}', space=vmem, size = 0x1000, scoped, tag = 'scoped mem for output reshape']
    #allocation1 [shape = 'u8[4096]{0}', space=vmem, size = 0x1000, scoped, tag = 'scoped mem for input reshape']
    %s3 = sshllo.u32 0, 4
    %v4 = vld [vmem:[%s0] sm:%s3]
    %5 = vst [vmem:[#allocation1] sm:%s3] %v4
    %v6 = vld [vmem:[#allocation1] sm:$0x1]
    %vm7 = vcmask 261120
    %8 = vst.msk [vmem:[#allocation0] sm:$0x1] %vm7, %v6
    %s9 = scalar_lea.vmem [#allocation1], 3
    %v10 = vld [vmem:[%s9] sm:$0x1]
    %11 = vrot.lane.b32.xlu0 %v10, 96
    %v12 = vpop.permute.xlu0 %11
    %vm13 = vcmask 1048320
    %14 = vst.msk [vmem:[#allocation0] sm:$0x1] %vm13, %v12
    %s15 = scalar_lea.vmem [#allocation1], 2
    %v16 = vld [vmem:[%s15] sm:$0x1]
    %17 = vrot.lane.b32.xlu0 %v16, 64
    %v18 = vpop.permute.xlu0 %17
    %vm19 = vcmask 785920
    %20 = vst.msk [vmem:[#allocation0] sm:$0x1] %vm19, %v18
    %s21 = scalar_lea.vmem [#allocation1], 1
    %v22 = vld [vmem:[%s21] sm:$0x1]
    %23 = vrot.lane.b32.xlu0 %v22, 32
    %v24 = vpop.permute.xlu0 %23
    %vm25 = vcmask 523520
    %26 = vst.msk [vmem:[#allocation0] sm:$0x1] %vm25, %v24
    %s28 = sshllo.u32 0, 1
    %v30 = vld [vmem:[#allocation0] sm:%s28]
    %s31 = sshllo.u32 0, 1
    %32 = vst [vmem:[%s1] sm:%s31] %v30

// kernel: tile.13
$region0: #{tile.13}
  #allocation0 [shape = 's32[1]{0}', space=sflag, size = 0x4, scoped, tag = 'scoped memory for tile.13']
  %s0 = inlined_call_operand.vmem [shape: f32[32], index: 0, kind: input, shape index: {}]
  %s1 = inlined_call_operand.vmem [shape: f32[4,32], index: 1, kind: output, shape index: {}]
  // Predicated region
  $region2: #{tile.13} parent=0 // pred_check
    _
  $region3: #{tile.13} parent=0 // pred_check_branch
    %3 = sbr.rel (0) target = $region5
  $region4: #{tile.13} parent=0 // pred_region
    _
  $region5: #{tile.13} parent=0 // pred_fallthru
    _
  %v4 = vld [vmem:[%s0] ss:$0 sm:$0xff]
  %5 = vst [vmem:[%s1] sm:$0xf] %v4

// kernel: gated_residual.1
$region0: #{gated_residual.1}
  #allocation0 [shape = 'u32[]', space=smem, size = 0x4, offset = 0x4, fixed_abs, tag = 'smem constant byte address 0x4 - core index']
  #allocation1 [shape = 'u32[144,128]{1,0:T(1,128)}', space=vmem, size = 0x12000, scoped, tag = 'internal scratch']
  %s0 = inlined_call_operand.vmem [shape: f32[4,128], index: 0, kind: input, shape index: {}]
  %s1 = inlined_call_operand.vmem [shape: f32[4,128], index: 1, kind: input, shape index: {}]
  %s2 = inlined_call_operand.vmem [shape: f32[2,128], index: 2, kind: input, shape index: {}]
  %s3 = inlined_call_operand.vmem [shape: f32[4,128], index: 3, kind: input, shape index: {}]
  %s4 = inlined_call_operand.vmem [shape: f32[4,128], index: 4, kind: output, shape index: {}]
  %s5 = sld [smem:[#allocation0]]
  $region26: #{gated_residual.1} parent=0
    _
  %s7 = ssub.s32 1, %s5
  %s8 = scalar_select 0, %s7, %s5
  // Predicated region
  $region2: #{gated_residual.1} parent=0 // pred_check
    _
  $region3: #{gated_residual.1} parent=0 // pred_check_branch
    %10 = sbr.rel (0) target = $region5
  $region4: #{gated_residual.1} parent=0 // pred_region
    _
  $region5: #{gated_residual.1} parent=0 // pred_fallthru
    _
  // Predicated region
  $region6: #{gated_residual.1} parent=0 // pred_check
    _
  $region7: #{gated_residual.1} parent=0 // pred_check_branch
    %12 = sbr.rel (0) target = $region9
  $region8: #{gated_residual.1} parent=0 // pred_region
    _
  $region9: #{gated_residual.1} parent=0 // pred_fallthru
    _
  // Predicated region
  $region10: #{gated_residual.1} parent=0 // pred_check
    _
  $region11: #{gated_residual.1} parent=0 // pred_check_branch
    %14 = sbr.rel (0) target = $region13
  $region12: #{gated_residual.1} parent=0 // pred_region
    _
  $region13: #{gated_residual.1} parent=0 // pred_fallthru
    _
  // Predicated region
  $region14: #{gated_residual.1} parent=0 // pred_check
    _
  $region15: #{gated_residual.1} parent=0 // pred_check_branch
    %16 = sbr.rel (0) target = $region17
  $region16: #{gated_residual.1} parent=0 // pred_region
    _
  $region17: #{gated_residual.1} parent=0 // pred_fallthru
    _
  %v17 = vld [vmem:[%s0] sm:$0xf]
  %v18 = vld [vmem:[%s1] sm:$0xf]
  %v19 = vld [vmem:[%s2] sm:$0x1]
  %v20 = vlaneseq
  %v21 = vshrl.u32 %v20, 7
  %v22 = vsub.s32 0, %v21
  %v23 = vrot.slane %v19, %v22
  %v24 = vmul.f32 %v17, %v23
  %v25 = vld [vmem:[%s2 + $0x1] sm:$0x1]
  %v26 = vlaneseq
  %v27 = vshrl.u32 %v26, 7
  %v28 = vsub.s32 0, %v27
  %v29 = vrot.slane %v25, %v28
  %v30 = vmul.f32 %v18, %v29
  %v31 = vadd.f32 %v24, %v30
  %v32 = vld [vmem:[%s3] sm:$0x1]
  %v33 = vlaneseq
  %v34 = vshrl.u32 %v33, 7
  %v35 = vsub.s32 0, %v34
  %v36 = vrot.slane %v32, %v35
  %v37 = vmul.f32 %v31, %v36
  %vm38 = vcmask 1043456
  %v39 = vsel %vm38, %v37, 0.0
  %40 = vadd.xlane.f32.xlu0 %v39
  %v41 = vpop.xlane.xlu0 %40
  %v42 = vsub.f32 0.0, %v41
  %v43 = vmul.f32 %v42, 1.442695
  %v44 = vpow.pop %v43
  %v45 = vadd.f32 %v44, 1.0
  %v46 = vrcp.pop %v45
  %v47 = vmul.f32 1.0, %v46
  %v48 = vmul.f32 %v47, %v36
  %v49 = vadd.f32 %v48, 0.0
  %v50 = vld [vmem:[%s3 + $0x1] sm:$0x1]
  %v51 = vlaneseq
  %v52 = vshrl.u32 %v51, 7
  %v53 = vsub.s32 0, %v52
  %v54 = vrot.slane %v50, %v53
  %v55 = vmul.f32 %v31, %v54
  %v56 = vsel %vm38, %v55, 0.0
  %57 = vadd.xlane.f32.xlu0 %v56
  %v58 = vpop.xlane.xlu0 %57
  %v59 = vsub.f32 0.0, %v58
  %v60 = vmul.f32 %v59, 1.442695
  %v61 = vpow.pop %v60
  %v62 = vadd.f32 %v61, 1.0
  %v63 = vrcp.pop %v62
  %v64 = vmul.f32 1.0, %v63
  %v65 = vmul.f32 %v64, %v54
  %v66 = vadd.f32 %v49, %v65
  %v67 = vld [vmem:[%s3 + $0x2] sm:$0x1]
  %v68 = vlaneseq
  %v69 = vshrl.u32 %v68, 7
  %v70 = vsub.s32 0, %v69
  %v71 = vrot.slane %v67, %v70
  %v72 = vmul.f32 %v31, %v71
  %v73 = vsel %vm38, %v72, 0.0
  %74 = vadd.xlane.f32.xlu0 %v73
  %v75 = vpop.xlane.xlu0 %74
  %v76 = vsub.f32 0.0, %v75
  %v77 = vmul.f32 %v76, 1.442695
  %v78 = vpow.pop %v77
  %v79 = vadd.f32 %v78, 1.0
  %v80 = vrcp.pop %v79
  %v81 = vmul.f32 1.0, %v80
  %v82 = vmul.f32 %v81, %v71
  %v83 = vadd.f32 %v66, %v82
  %v84 = vld [vmem:[%s3 + $0x3] sm:$0x1]
  %v85 = vlaneseq
  %v86 = vshrl.u32 %v85, 7
  %v87 = vsub.s32 0, %v86
  %v88 = vrot.slane %v84, %v87
  %v89 = vmul.f32 %v31, %v88
  %v90 = vsel %vm38, %v89, 0.0
  %91 = vadd.xlane.f32.xlu0 %v90
  %v92 = vpop.xlane.xlu0 %91
  %v93 = vsub.f32 0.0, %v92
  %v94 = vmul.f32 %v93, 1.442695
  %v95 = vpow.pop %v94
  %v96 = vadd.f32 %v95, 1.0
  %v97 = vrcp.pop %v96
  %v98 = vmul.f32 1.0, %v97
  %v99 = vmul.f32 %v98, %v88
  %v100 = vadd.f32 %v83, %v99
  %v101 = vsub.f32 %v17, %v18
  %v102 = vmul.f32 %v100, %v101
  %v103 = vadd.f32 %v18, %v102
  %104 = vst [vmem:[%s4] sm:$0xf] %v103
  // Predicated region
  $region18: #{gated_residual.1} parent=0 // pred_check
    _
  $region19: #{gated_residual.1} parent=0 // pred_check_branch
    %106 = sbr.rel (0) target = $region21
  $region20: #{gated_residual.1} parent=0 // pred_region
    _
  $region21: #{gated_residual.1} parent=0 // pred_fallthru
    _
  // Predicated region
  $region22: #{gated_residual.1} parent=0 // pred_check
    _
  $region23: #{gated_residual.1} parent=0 // pred_check_branch
    %108 = sbr.rel (0) target = $region25
  $region24: #{gated_residual.1} parent=0 // pred_region
    _
  $region25: #{gated_residual.1} parent=0 // pred_fallthru
    _

</llo_original>
